<compile_context>
chip_gen: v5e
topology: v5e:2x2
jax: 0.10.0
libtpu: 0.0.40
codegen_flags: <defaults>
</compile_context>

<pallas_src>
import jax
import jax.numpy as jnp
from jax.experimental import pallas as pl
from jax.experimental.pallas import tpu as pltpu


def value_net_kernel(x_ref, w1_ref, w2_ref, o_ref):
    x_t = x_ref[...]      # (8, TM)   rows 0..2 = x^T, row 3 = 1.0 (bias), rows 4..7 = 0
    w1a = w1_ref[...]     # (128, 8)  cols 0..2 = w1^T, col 3 = b1, cols 4..7 = 0
    w2p = w2_ref[...]     # (8, 128)  row 0 = w2^T, element [1,0] = b2, rest = 0

    # Layer 1 (+bias folded via the ones-row of x_t) on the MXU: (128,8)@(8,TM).
    h = jnp.dot(w1a, x_t, preferred_element_type=jnp.float32)     # (128, TM)
    h = jnp.maximum(h, 0.0)

    # Layer 2 on the MXU: (8,128)@(128,TM); only row 0 carries w2.
    z = jnp.dot(w2p, h, preferred_element_type=jnp.float32)       # (8, TM)

    b2 = w2_ref[1:2, 0:1]                                         # (1, 1) scalar
    o_ref[...] = (z[0:1, :] + b2).astype(o_ref.dtype)             # lane-dense (1, TM) store


def value_net_forward(x, w1, b1, w2, b2, *, tm_max=2048):
    """x: (B, K<=7). w1: (K, 128), b1: (1,128) or (128,), w2: (128, 1), b2: (1,1) or scalar."""
    B, K = x.shape
    H = w1.shape[1]
    assert K + 1 <= 8, "feature dim must fit the K-padded (8, B) layout"

    # Batch tile: multiple of 128 (unmasked lane-dense stores), single step if possible.
    tm_max = max(128, (tm_max // 128) * 128)
    B128 = max(128, ((B + 127) // 128) * 128)
    TM = min(tm_max, B128)
    B_pad = ((B + TM - 1) // TM) * TM

    # x -> (8, B_pad): transposed + feature-padded; row K is 1.0 (folds layer-1 bias).
    xp = x.astype(jnp.float32)
    if B_pad != B:
        xp = jnp.pad(xp, ((0, B_pad - B), (0, 0)))
    x_t = jnp.concatenate(
        [xp.T,
         jnp.ones((1, B_pad), jnp.float32),
         jnp.zeros((8 - K - 1, B_pad), jnp.float32)],
        axis=0)                                           # (8, B_pad)

    # Layer-1 params packed as (H, 8): cols 0..K-1 = w1^T, col K = b1, rest 0.
    w1a = jnp.zeros((H, 8), jnp.float32)
    w1a = w1a.at[:, :K].set(w1.astype(jnp.float32).T)
    w1a = w1a.at[:, K].set(jnp.reshape(b1, (H,)).astype(jnp.float32))

    # Layer-2 params packed as (8, H): row 0 = w2^T, [1,0] = b2, rest 0.
    w2p = jnp.zeros((8, H), jnp.float32)
    w2p = w2p.at[0, :].set(jnp.reshape(w2, (H,)).astype(jnp.float32))
    w2p = w2p.at[1, 0].set(jnp.asarray(b2, jnp.float32).reshape(()))

    grid = (B_pad // TM,)
    out = pl.pallas_call(
        value_net_kernel,
        out_shape=jax.ShapeDtypeStruct((1, B_pad), jnp.float32),
        grid_spec=pltpu.PrefetchScalarGridSpec(
            num_scalar_prefetch=0,
            grid=grid,
            in_specs=[
                pl.BlockSpec((8, TM), lambda i: (0, i)),   # batch tile of x^T (batch on lanes)
                pl.BlockSpec((H, 8), lambda i: (0, 0)),    # packed layer-1 params, VMEM-resident
                pl.BlockSpec((8, H), lambda i: (0, 0)),    # packed layer-2 params, VMEM-resident
            ],
            out_specs=pl.BlockSpec((1, TM), lambda i: (0, i)),  # lane-dense output tile
        ),
        compiler_params=pltpu.CompilerParams(
            dimension_semantics=("parallel",),             # shards grid steps across TCs on v7x
        ),
    )(x_t, w1a, w2p)

    return out[0, :B].reshape(B, 1)


def init_params(key):
    # Deterministic init mimicking PyTorch nn.Linear default:
    # U(-1/sqrt(fan_in), 1/sqrt(fan_in)) for both weight and bias.
    k1, k2, k3, k4 = jax.random.split(key, 4)
    bound1 = 1.0 / jnp.sqrt(3.0)
    bound2 = 1.0 / jnp.sqrt(128.0)
    w1 = jax.random.uniform(k1, (3, 128), jnp.float32, -bound1, bound1)
    b1 = jax.random.uniform(k2, (1, 128), jnp.float32, -bound1, bound1)
    w2 = jax.random.uniform(k3, (128, 1), jnp.float32, -bound2, bound2)
    b2 = jax.random.uniform(k4, (1, 1), jnp.float32, -bound2, bound2)
    return w1, b1, w2, b2


def reference_forward(x, w1, b1, w2, b2):
    h = jnp.maximum(x @ w1 + b1, 0.0)
    return h @ w2 + b2


if __name__ == "__main__":
    key = jax.random.PRNGKey(0)
    kp, kx, kx2 = jax.random.split(key, 3)
    w1, b1, w2, b2 = init_params(kp)

    # Pendulum observation dim is 3; small batch of 8 (single 128-wide tile).
    x = jax.random.normal(kx, (8, 3), jnp.float32)
    y = jax.block_until_ready(value_net_forward(x, w1, b1, w2, b2))
    y_ref = reference_forward(x, w1, b1, w2, b2)
    assert y.shape == (8, 1)
    assert jnp.allclose(y, y_ref, atol=1e-4, rtol=1e-4)

    # Larger batch, still a single grid step (B=300 -> TM=384).
    x2 = jax.random.normal(kx2, (300, 3), jnp.float32)
    y2 = jax.block_until_ready(value_net_forward(x2, w1, b1, w2, b2))
    y2_ref = reference_forward(x2, w1, b1, w2, b2)
    assert y2.shape == (300, 1)
    assert jnp.allclose(y2, y2_ref, atol=1e-4, rtol=1e-4)

    # Exercise the multi-grid-step ("parallel") path cheaply: tm_max=128 -> grid of 3.
    y3 = jax.block_until_ready(value_net_forward(x2, w1, b1, w2, b2, tm_max=128))
    assert jnp.allclose(y3, y2_ref, atol=1e-4, rtol=1e-4)

    print("KERNEL_OK")
</pallas_src>

<mosaic_0001>
module attributes {stable_mosaic.version = 11 : i64} {
  func.func @value_net_kernel(%arg0: i32, %arg1: memref<8x128xf32, #tpu.memory_space<vmem>>, %arg2: memref<128x8xf32, #tpu.memory_space<vmem>>, %arg3: memref<8x128xf32, #tpu.memory_space<vmem>>, %arg4: memref<1x128xf32, #tpu.memory_space<vmem>>) attributes {dimension_semantics = [#tpu.dimension_semantics<parallel>], iteration_bounds = array<i64: 1>, scalar_prefetch = 0 : i64, scratch_operands = 0 : i64, tpu.core_type = #tpu.core_type<tc>, window_params = [{transform_indices = @transform_0, window_bounds = array<i64: 8, 128>}, {pipeline_mode = #tpu.pipeline_mode<synchronous>, transform_indices = @transform_1, window_bounds = array<i64: 128, 8>}, {pipeline_mode = #tpu.pipeline_mode<synchronous>, transform_indices = @transform_2, window_bounds = array<i64: 8, 128>}, {transform_indices = @transform_3, window_bounds = array<i64: 1, 128>}]} {
    %c0 = arith.constant 0 : index
    %c0_0 = arith.constant 0 : index
    %0 = vector.load %arg1[%c0, %c0_0] : memref<8x128xf32, #tpu.memory_space<vmem>>, vector<8x128xf32>
    %c0_1 = arith.constant 0 : index
    %c0_2 = arith.constant 0 : index
    %1 = vector.load %arg2[%c0_1, %c0_2] : memref<128x8xf32, #tpu.memory_space<vmem>>, vector<128x8xf32>
    %c0_3 = arith.constant 0 : index
    %c0_4 = arith.constant 0 : index
    %2 = vector.load %arg3[%c0_3, %c0_4] : memref<8x128xf32, #tpu.memory_space<vmem>>, vector<8x128xf32>
    %cst = arith.constant dense<0.000000e+00> : vector<128x128xf32>
    %3 = tpu.matmul %1, %0, %cst {dimension_numbers = #tpu.dot_dimension_numbers<[1], [0], [0], [1], [0, 0, 1, 1], [], []>} : vector<128x8xf32>, vector<8x128xf32>, vector<128x128xf32> -> vector<128x128xf32>
    %cst_5 = arith.constant 0.000000e+00 : f32
    %4 = vector.broadcast %cst_5 : f32 to vector<128x128xf32>
    %5 = arith.maximumf %3, %4 : vector<128x128xf32>
    %cst_6 = arith.constant dense<0.000000e+00> : vector<8x128xf32>
    %6 = tpu.matmul %2, %5, %cst_6 {dimension_numbers = #tpu.dot_dimension_numbers<[1], [0], [0], [1], [0, 0, 1, 1], [], []>} : vector<8x128xf32>, vector<128x128xf32>, vector<8x128xf32> -> vector<8x128xf32>
    %c1 = arith.constant 1 : index
    %c0_7 = arith.constant 0 : index
    %7 = vector.load %arg3[%c1, %c0_7] : memref<8x128xf32, #tpu.memory_space<vmem>>, vector<1x1xf32>
    %8 = vector.extract_strided_slice %6 {offsets = [0, 0], sizes = [1, 128], strides = [1, 1]} : vector<8x128xf32> to vector<1x128xf32>
    %9 = vector.broadcast %7 : vector<1x1xf32> to vector<1x128xf32>
    %10 = arith.addf %8, %9 : vector<1x128xf32>
    %c0_8 = arith.constant 0 : index
    %c0_9 = arith.constant 0 : index
    %11 = vector.load %arg4[%c0_8, %c0_9] : memref<1x128xf32, #tpu.memory_space<vmem>>, vector<1x128xf32>
    tpu.vector_store %arg4[%c0_8, %c0_9], %10 {strides = array<i32>} : memref<1x128xf32, #tpu.memory_space<vmem>>, vector<1x128xf32>,
    return
  }
  func.func @transform_0(%arg0: i32) -> (i32, i32) {
    %c0_i32 = arith.constant 0 : i32
    %c0_i32_0 = arith.constant 0 : i32
    return %c0_i32, %arg0 : i32, i32
  }
  func.func @transform_1(%arg0: i32) -> (i32, i32) {
    %c0_i32 = arith.constant 0 : i32
    %c0_i32_0 = arith.constant 0 : i32
    %c0_i32_1 = arith.constant 0 : i32
    return %c0_i32, %c0_i32_0 : i32, i32
  }
  func.func @transform_2(%arg0: i32) -> (i32, i32) {
    %c0_i32 = arith.constant 0 : i32
    %c0_i32_0 = arith.constant 0 : i32
    %c0_i32_1 = arith.constant 0 : i32
    return %c0_i32, %c0_i32_0 : i32, i32
  }
  func.func @transform_3(%arg0: i32) -> (i32, i32) {
    %c0_i32 = arith.constant 0 : i32
    %c0_i32_0 = arith.constant 0 : i32
    return %c0_i32, %arg0 : i32, i32
  }
}

</mosaic_0001>

<llo_original>
// kernel: tpu_custom_call.1
$region0: #{tpu_custom_call.1}
  #allocation0 [shape = 'u32[]', space=smem, size = 0x4, offset = 0x4, fixed_abs, tag = 'smem constant byte address 0x4 - core index']
  #allocation1 [shape = 'u32[72,128]{1,0:T(1,128)}', space=vmem, size = 0x9000, scoped, tag = 'internal scratch']
  %s0 = inlined_call_operand.vmem [shape: f32[8,128], index: 0, kind: input, shape index: {}]
  %s1 = inlined_call_operand.vmem [shape: f32[128,8], index: 1, kind: input, shape index: {}]
  %s2 = inlined_call_operand.vmem [shape: f32[8,128], index: 2, kind: input, shape index: {}]
  %s3 = inlined_call_operand.hbm [shape: f32[1,128], index: 3, kind: output, shape index: {}]
  %s4 = sld [smem:[#allocation0]]
  $region22: #{tpu_custom_call.1} parent=0
    _
  %s6 = ssub.s32 1, %s4
  %s7 = scalar_select 0, %s6, %s4
  $region1: #{tpu_custom_call.1} parent=0
    #allocation2 [shape = 'u8[512]{0}', space=vmem, size = 0x400, scoped, tag = 'output window, operand 0, single buffered']
    #allocation3 [shape = 's32[1]{0}', space=sflag, size = 0x4, scoped, tag = 'scoped memory for tpu_custom_call.1']
    %8 = vsyncpa [#allocation3], 0
    // Predicated region
    $region2: #{tpu_custom_call.1} parent=1 // pred_check
      _
    $region3: #{tpu_custom_call.1} parent=1 // pred_check_branch
      %10 = sbr.rel (0) target = $region5
    $region4: #{tpu_custom_call.1} parent=1 // pred_region
      _
    $region5: #{tpu_custom_call.1} parent=1 // pred_fallthru
      _
    // Predicated region
    $region6: #{tpu_custom_call.1} parent=1 // pred_check
      _
    $region7: #{tpu_custom_call.1} parent=1 // pred_check_branch
      %12 = sbr.rel (0) target = $region9
    $region8: #{tpu_custom_call.1} parent=1 // pred_region
      _
    $region9: #{tpu_custom_call.1} parent=1 // pred_fallthru
      _
    // Predicated region
    $region10: #{tpu_custom_call.1} parent=1 // pred_check
      _
    $region11: #{tpu_custom_call.1} parent=1 // pred_check_branch
      %14 = sbr.rel (0) target = $region13
    $region12: #{tpu_custom_call.1} parent=1 // pred_region
      _
    $region13: #{tpu_custom_call.1} parent=1 // pred_fallthru
      _
    %v15 = vld [vmem:[%s0] sm:$0xff]
    %v16 = vld [vmem:[%s1] sm:$0xff]
    %v17 = vld [vmem:[%s1 + $0x8] sm:$0xff]
    %v18 = vld [vmem:[%s1 + $0x10] sm:$0xff]
    %v19 = vld [vmem:[%s1 + $0x18] sm:$0xff]
    %v20 = vld [vmem:[%s1 + $0x20] sm:$0xff]
    %v21 = vld [vmem:[%s1 + $0x28] sm:$0xff]
    %v22 = vld [vmem:[%s1 + $0x30] sm:$0xff]
    %v23 = vld [vmem:[%s1 + $0x38] sm:$0xff]
    %v24 = vld [vmem:[%s1 + $0x40] sm:$0xff]
    %v25 = vld [vmem:[%s1 + $0x48] sm:$0xff]
    %v26 = vld [vmem:[%s1 + $0x50] sm:$0xff]
    %v27 = vld [vmem:[%s1 + $0x58] sm:$0xff]
    %v28 = vld [vmem:[%s1 + $0x60] sm:$0xff]
    %v29 = vld [vmem:[%s1 + $0x68] sm:$0xff]
    %v30 = vld [vmem:[%s1 + $0x70] sm:$0xff]
    %v31 = vld [vmem:[%s1 + $0x78] sm:$0xff]
    %v32 = vld [vmem:[%s2] sm:$0xff]
    %vm33 = vcmask 64512
    %v35 = vsel %vm33, %v16, 0
    %v38 = vsel %vm33, %v17, 0
    %v41 = vsel %vm33, %v18, 0
    %v44 = vsel %vm33, %v19, 0
    %v47 = vsel %vm33, %v20, 0
    %v50 = vsel %vm33, %v21, 0
    %v53 = vsel %vm33, %v22, 0
    %v56 = vsel %vm33, %v23, 0
    %v59 = vsel %vm33, %v24, 0
    %v62 = vsel %vm33, %v25, 0
    %v65 = vsel %vm33, %v26, 0
    %v68 = vsel %vm33, %v27, 0
    %v71 = vsel %vm33, %v28, 0
    %v74 = vsel %vm33, %v29, 0
    %v77 = vsel %vm33, %v30, 0
    %v80 = vsel %vm33, %v31, 0
    %82 = vmatpush.msra.mxu0 0.0
    %83 = vmatpush.msra.mxu0 0.0
    %84 = vmatpush.msra.mxu0 0.0
    %85 = vmatpush.msra.mxu0 0.0
    %86 = vmatpush.msra.mxu0 0.0
    %87 = vmatpush.msra.mxu0 0.0
    %88 = vmatpush.msra.mxu0 0.0
    %89 = vmatpush.msra.mxu0 0.0
    %90 = vmatpush.msra.mxu0 0.0
    %91 = vmatpush.msra.mxu0 0.0
    %92 = vmatpush.msra.mxu0 0.0
    %93 = vmatpush.msra.mxu0 0.0
    %94 = vmatpush.msra.mxu0 0.0
    %95 = vmatpush.msra.mxu0 0.0
    %96 = vmatpush.msra.mxu0 0.0
    %97 = vmatpush.msra.mxu0 %v15
    %98 = vmatmul.f32.gmra.mxu0 %v35
    %v99 = vpop.f32.mrf.mxu0
    %v100 = vadd.f32 0.0, %v99
    %101 = vmatmul.f32.gmra.mxu0 %v38
    %v102 = vpop.f32.mrf.mxu0
    %v103 = vadd.f32 0.0, %v102
    %104 = vmatmul.f32.gmra.mxu0 %v41
    %v105 = vpop.f32.mrf.mxu0
    %v106 = vadd.f32 0.0, %v105
    %107 = vmatmul.f32.gmra.mxu0 %v44
    %v108 = vpop.f32.mrf.mxu0
    %v109 = vadd.f32 0.0, %v108
    %110 = vmatmul.f32.gmra.mxu0 %v47
    %v111 = vpop.f32.mrf.mxu0
    %v112 = vadd.f32 0.0, %v111
    %113 = vmatmul.f32.gmra.mxu0 %v50
    %v114 = vpop.f32.mrf.mxu0
    %v115 = vadd.f32 0.0, %v114
    %116 = vmatmul.f32.gmra.mxu0 %v53
    %v117 = vpop.f32.mrf.mxu0
    %v118 = vadd.f32 0.0, %v117
    %119 = vmatmul.f32.gmra.mxu0 %v56
    %v120 = vpop.f32.mrf.mxu0
    %v121 = vadd.f32 0.0, %v120
    %122 = vmatmul.f32.gmra.mxu0 %v59
    %v123 = vpop.f32.mrf.mxu0
    %v124 = vadd.f32 0.0, %v123
    %125 = vmatmul.f32.gmra.mxu0 %v62
    %v126 = vpop.f32.mrf.mxu0
    %v127 = vadd.f32 0.0, %v126
    %128 = vmatmul.f32.gmra.mxu0 %v65
    %v129 = vpop.f32.mrf.mxu0
    %v130 = vadd.f32 0.0, %v129
    %131 = vmatmul.f32.gmra.mxu0 %v68
    %v132 = vpop.f32.mrf.mxu0
    %v133 = vadd.f32 0.0, %v132
    %134 = vmatmul.f32.gmra.mxu0 %v71
    %v135 = vpop.f32.mrf.mxu0
    %v136 = vadd.f32 0.0, %v135
    %137 = vmatmul.f32.gmra.mxu0 %v74
    %v138 = vpop.f32.mrf.mxu0
    %v139 = vadd.f32 0.0, %v138
    %140 = vmatmul.f32.gmra.mxu0 %v77
    %v141 = vpop.f32.mrf.mxu0
    %v142 = vadd.f32 0.0, %v141
    %143 = vmatmul.f32.gmra.mxu0 %v80
    %v144 = vpop.f32.mrf.mxu0
    %v145 = vadd.f32 0.0, %v144
    %146 = vdwg.mxu0
    %v147 = vmax.f32 %v100, 0.0
    %v148 = vmax.f32 %v103, 0.0
    %v149 = vmax.f32 %v106, 0.0
    %v150 = vmax.f32 %v109, 0.0
    %v151 = vmax.f32 %v112, 0.0
    %v152 = vmax.f32 %v115, 0.0
    %v153 = vmax.f32 %v118, 0.0
    %v154 = vmax.f32 %v121, 0.0
    %v155 = vmax.f32 %v124, 0.0
    %v156 = vmax.f32 %v127, 0.0
    %v157 = vmax.f32 %v130, 0.0
    %v158 = vmax.f32 %v133, 0.0
    %v159 = vmax.f32 %v136, 0.0
    %v160 = vmax.f32 %v139, 0.0
    %v161 = vmax.f32 %v142, 0.0
    %v162 = vmax.f32 %v145, 0.0
    %163 = vmatpush.msra.mxu0 %v162
    %164 = vmatpush.msra.mxu0 %v161
    %165 = vmatpush.msra.mxu0 %v160
    %166 = vmatpush.msra.mxu0 %v159
    %167 = vmatpush.msra.mxu0 %v158
    %168 = vmatpush.msra.mxu0 %v157
    %169 = vmatpush.msra.mxu0 %v156
    %170 = vmatpush.msra.mxu0 %v155
    %171 = vmatpush.msra.mxu0 %v154
    %172 = vmatpush.msra.mxu0 %v153
    %173 = vmatpush.msra.mxu0 %v152
    %174 = vmatpush.msra.mxu0 %v151
    %175 = vmatpush.msra.mxu0 %v150
    %176 = vmatpush.msra.mxu0 %v149
    %177 = vmatpush.msra.mxu0 %v148
    %178 = vmatpush.msra.mxu0 %v147
    %179 = vmatmul.f32.gmra.mxu0 %v32
    %v180 = vpop.f32.mrf.mxu0
    %v181 = vadd.f32 0.0, %v180
    %182 = vdwg.mxu0
    %v183 = vld [vmem:[%s2 + $0x1] sm:$0x1]
    %185 = vset.pattern.permute.xlu0 0
    %186 = vperm.xlu0 %185, %v183
    %v187 = vpop.permute.xlu0 %186
    %v189 = vadd.f32 %v181, %v187
    %190 = vst [vmem:[#allocation2] sm:$0x1] %v189
    // Predicated region
    $region14: #{tpu_custom_call.1} parent=1 // pred_check
      _
    $region15: #{tpu_custom_call.1} parent=1 // pred_check_branch
      %192 = sbr.rel (0) target = $region17
    $region16: #{tpu_custom_call.1} parent=1 // pred_region
      %194 = vsyncadd [#allocation3], 0
      %s196 = sshll.u32 [#allocation2], 4
      %s197 = int_to_ptr.vmem [resolvable:$true] %s196
      %s198 = sshll.u32 %s3, 4
      %s199 = int_to_ptr.hbm [resolvable:$true] %s198
      %201 = dma.vmem_to_hbm [thread:$0]  %s197, 16, %s199, [#allocation3]
    $region17: #{tpu_custom_call.1} parent=1 // pred_fallthru
      _
    // Predicated region
    $region18: #{tpu_custom_call.1} parent=1 // pred_check
      _
    $region19: #{tpu_custom_call.1} parent=1 // pred_check_branch
      %203 = sbr.rel (0) target = $region21
    $region20: #{tpu_custom_call.1} parent=1 // pred_region
      %205 = dma.done [#allocation3], 16
    $region21: #{tpu_custom_call.1} parent=1 // pred_fallthru
      _
    %206 = vsyncpa [#allocation3], 1

</llo_original>
